<compile_context>
chip_gen: v6e
topology: v6e:2x2x1
jax: 0.10.0
libtpu: 0.0.40
codegen_flags: <defaults>
</compile_context>

<pallas_src>
import functools

import jax
import jax.numpy as jnp
from jax.experimental import pallas as pl
from jax.experimental.pallas import tpu as pltpu


def _round_up(x, m):
    return (x + m - 1) // m * m


def _cdiv(a, b):
    return -(-a // b)


# --------------------------------------------------------------------------- #
# Kernel
# --------------------------------------------------------------------------- #
def _discriminator_xx_kernel(x_ref, rec_ref, w1a_ref, w1b_ref, b1_ref,
                             w2_ref, b2_ref, logits_ref, mid_ref,
                             *, negative_slope, compute_dtype):
    x = x_ref[...]
    r = rec_ref[...]
    if compute_dtype is not None:
        # Cast *inside* the kernel (free VPU op on data already in VMEM) instead
        # of an extra wrapper-side HBM pass.
        x = x.astype(compute_dtype)
        r = r.astype(compute_dtype)

    # cat((X, rec_X), dim=1) @ W1  ==  X @ W1[:in] + rec_X @ W1[in:]
    h = jnp.dot(x, w1a_ref[...], preferred_element_type=jnp.float32)
    h = h + jnp.dot(r, w1b_ref[...], preferred_element_type=jnp.float32)
    h = h + b1_ref[...]                               # bias in f32
    h = jnp.where(h > 0, h, negative_slope * h)       # LeakyReLU in f32
    # Dropout(p) is identity at inference time.
    # TODO(synk): train-mode dropout would need pltpu.prng_seed/prng_random_bits masking.
    mid_ref[...] = h.astype(mid_ref.dtype)

    # NOTE(bf16 path): logits are computed from h cast to W2's dtype; with
    # mid_dtype=f32 + compute_dtype=bf16 this differs from mid @ W2 by bf16
    # rounding (well inside the mixed-precision tolerance).
    logits = jnp.dot(h.astype(w2_ref.dtype), w2_ref[...],
                     preferred_element_type=jnp.float32) + b2_ref[...]
    logits_ref[...] = logits.astype(logits_ref.dtype)


# --------------------------------------------------------------------------- #
# One-time parameter preparation (hoisted out of the forward path)
# --------------------------------------------------------------------------- #
def prepare_discriminator_xx_params(params, in_features, *, compute_dtype=None):
    """Pad weights to lane-dense (multiple-of-128) widths, split W1 so the concat
    never materializes, and optionally pre-cast matmul weights to compute_dtype.
    Call once at init; pass the result to discriminator_xx_forward."""
    w1, b1, w2, b2 = params          # (2*in, out), (1, out), (out, n_cls), (1, n_cls)
    assert w1.shape[0] == 2 * in_features
    out_features = w1.shape[1]
    n_classes = w2.shape[1]

    pad_out = _round_up(out_features, 128)
    pad_cls = _round_up(n_classes, 128)
    w1p = jnp.pad(w1, ((0, 0), (0, pad_out - out_features)))
    b1p = jnp.pad(b1, ((0, 0), (0, pad_out - out_features)))
    w2p = jnp.pad(w2, ((0, pad_out - out_features), (0, pad_cls - n_classes)))
    b2p = jnp.pad(b2, ((0, 0), (0, pad_cls - n_classes)))

    w1a, w1b = w1p[:in_features], w1p[in_features:]
    if compute_dtype is not None:
        w1a = w1a.astype(compute_dtype)
        w1b = w1b.astype(compute_dtype)
        w2p = w2p.astype(compute_dtype)

    return dict(w1a=w1a, w1b=w1b, b1=b1p, w2=w2p, b2=b2p,
                in_features=in_features, out_features=out_features,
                n_classes=n_classes, pad_out=pad_out, pad_cls=pad_cls,
                compute_dtype=compute_dtype)


# --------------------------------------------------------------------------- #
# Forward
# --------------------------------------------------------------------------- #
def discriminator_xx_forward(X, rec_X, prepared, *, negative_slope=0.2,
                             bm_max=1024, mid_dtype=jnp.float32,
                             vmem_budget_bytes=20 << 20):
    """Fused DiscriminatorXX forward.  Returns (logits[f32], mid_layer[mid_dtype])."""
    in_features = prepared["in_features"]
    out_features = prepared["out_features"]
    n_classes = prepared["n_classes"]
    pad_out = prepared["pad_out"]
    pad_cls = prepared["pad_cls"]
    compute_dtype = prepared["compute_dtype"]
    w1a, w1b = prepared["w1a"], prepared["w1b"]
    b1, w2, b2 = prepared["b1"], prepared["w2"], prepared["b2"]

    B = X.shape[0]
    assert X.shape == (B, in_features) and rec_X.shape == (B, in_features)

    # ---- batch-tile selection from a VMEM budget -------------------------- #
    mid_item = jnp.dtype(mid_dtype).itemsize
    min_item = min(mid_item, X.dtype.itemsize, rec_X.dtype.itemsize)
    sublane = 8 * (4 // min_item)          # 8 for f32 streams, 16 if any bf16

    # double-buffered streaming bytes per batch row (inputs + both outputs)
    per_row = 2 * (in_features * (X.dtype.itemsize + rec_X.dtype.itemsize)
                   + pad_out * mid_item + pad_cls * 4)
    weight_bytes = sum(int(a.size) * a.dtype.itemsize
                       for a in (w1a, w1b, b1, w2, b2))
    avail = max(vmem_budget_bytes - 2 * weight_bytes, 1 << 20)
    bm_cap = max(sublane, min(bm_max, (avail // per_row) // sublane * sublane))

    if B <= bm_cap:
        # Single full-batch tile: no serial per-step overhead on v5e/v6e.
        bm = _round_up(max(B, sublane), sublane)
        n_steps = 1
    else:
        n_steps = _cdiv(B, bm_cap)
        if n_steps % 2:                    # even step count -> balanced v7x megacore
            n_steps += 1
        bm = _round_up(_cdiv(B, n_steps), sublane)
    padded_B = bm * n_steps

    x_in, rec_in = X, rec_X
    if padded_B != B:
        x_in = jnp.pad(x_in, ((0, padded_B - B), (0, 0)))
        rec_in = jnp.pad(rec_in, ((0, padded_B - B), (0, 0)))

    kernel = functools.partial(_discriminator_xx_kernel,
                               negative_slope=float(negative_slope),
                               compute_dtype=compute_dtype)

    def resident(shape):
        return pl.BlockSpec(shape, lambda i: (0,) * len(shape))

    logits_p, mid_p = pl.pallas_call(
        kernel,
        out_shape=(
            jax.ShapeDtypeStruct((padded_B, pad_cls), jnp.float32),   # logits (padded)
            jax.ShapeDtypeStruct((padded_B, pad_out), mid_dtype),     # mid_layer (padded)
        ),
        grid_spec=pltpu.PrefetchScalarGridSpec(
            num_scalar_prefetch=0,
            grid=(n_steps,),
            in_specs=[
                pl.BlockSpec((bm, in_features), lambda i: (i, 0)),    # X tile
                pl.BlockSpec((bm, in_features), lambda i: (i, 0)),    # rec_X tile
                resident(w1a.shape),                                  # W1[:in]
                resident(w1b.shape),                                  # W1[in:]
                resident(b1.shape),                                   # b1
                resident(w2.shape),                                   # W2
                resident(b2.shape),                                   # b2
            ],
            out_specs=[
                pl.BlockSpec((bm, pad_cls), lambda i: (i, 0)),        # logits
                pl.BlockSpec((bm, pad_out), lambda i: (i, 0)),        # mid_layer
            ],
        ),
        compiler_params=pltpu.CompilerParams(
            dimension_semantics=("parallel",),
            vmem_limit_bytes=32 << 20),
    )(x_in, rec_in, w1a, w1b, b1, w2, b2)

    return logits_p[:B, :n_classes], mid_p[:B, :out_features]


# --------------------------------------------------------------------------- #
# Reference + synthetic init
# --------------------------------------------------------------------------- #
def init_discriminator_params(key, in_features, out_features, n_classes=1,
                              dtype=jnp.float32):
    """Deterministic synthetic init matching nn.Linear shapes (stored as (in, out))."""
    ks = jax.random.split(key, 4)

    def lin(kw, kb, d_in, d_out):
        scale = 1.0 / jnp.sqrt(jnp.float32(d_in))
        w = jax.random.uniform(kw, (d_in, d_out), dtype, -scale, scale)
        b = jax.random.uniform(kb, (1, d_out), dtype, -scale, scale)
        return w, b

    w1, b1 = lin(ks[0], ks[1], 2 * in_features, out_features)
    w2, b2 = lin(ks[2], ks[3], out_features, n_classes)
    return (w1, b1, w2, b2)


def discriminator_xx_ref(X, rec_X, params, negative_slope=0.2):
    w1, b1, w2, b2 = params
    xx = jnp.concatenate([X, rec_X], axis=1)
    h = xx @ w1 + b1
    mid = jnp.where(h > 0, h, negative_slope * h)   # LeakyReLU; Dropout = identity (eval)
    logits = mid @ w2 + b2
    return logits, mid


if __name__ == "__main__":
    key = jax.random.PRNGKey(0)

    # --- config 1: small shapes, f32 and bf16 paths -----------------------------
    in_f, out_f, n_cls, batch = 32, 64, 1, 64
    kx, kr, kp, k2 = jax.random.split(key, 4)
    X = jax.random.normal(kx, (batch, in_f), jnp.float32)
    R = jax.random.normal(kr, (batch, in_f), jnp.float32)
    params = init_discriminator_params(kp, in_f, out_f, n_cls)
    ref_logits, ref_mid = discriminator_xx_ref(X, R, params)

    # f32 path (exact)
    prep = prepare_discriminator_xx_params(params, in_f)
    logits, mid = discriminator_xx_forward(X, R, prep)
    logits, mid = jax.block_until_ready((logits, mid))
    assert logits.shape == (batch, n_cls) and mid.shape == (batch, out_f)
    assert jnp.allclose(logits, ref_logits, atol=1e-4, rtol=1e-4)
    assert jnp.allclose(mid, ref_mid, atol=1e-4, rtol=1e-4)

    # bf16 MXU inputs + bf16 mid output (f32 accumulation) — looser tolerance
    prep_bf = prepare_discriminator_xx_params(params, in_f,
                                              compute_dtype=jnp.bfloat16)
    logits_bf, mid_bf = discriminator_xx_forward(X, R, prep_bf,
                                                 mid_dtype=jnp.bfloat16)
    logits_bf, mid_bf = jax.block_until_ready((logits_bf, mid_bf))
    assert jnp.allclose(logits_bf, ref_logits, atol=5e-2, rtol=5e-2)
    assert jnp.allclose(mid_bf.astype(jnp.float32), ref_mid, atol=5e-2, rtol=5e-2)

    # --- config 2: non-lane-aligned widths + ragged batch (padding path) --------
    in2, out2, cls2, b2_ = 48, 96, 1, 37
    k2x, k2r, k2p = jax.random.split(k2, 3)
    X2 = jax.random.normal(k2x, (b2_, in2), jnp.float32)
    R2 = jax.random.normal(k2r, (b2_, in2), jnp.float32)
    p2 = init_discriminator_params(k2p, in2, out2, cls2)
    prep2 = prepare_discriminator_xx_params(p2, in2)
    lg2, md2 = discriminator_xx_forward(X2, R2, prep2)
    lg2, md2 = jax.block_until_ready((lg2, md2))
    rlg2, rmd2 = discriminator_xx_ref(X2, R2, p2)
    assert lg2.shape == (b2_, cls2) and md2.shape == (b2_, out2)
    assert jnp.allclose(lg2, rlg2, atol=1e-4, rtol=1e-4)
    assert jnp.allclose(md2, rmd2, atol=1e-4, rtol=1e-4)

    print("KERNEL_OK")
</pallas_src>

<mosaic_0001>
module attributes {stable_mosaic.version = 11 : i64} {
  func.func @_discriminator_xx_kernel(%arg0: i32, %arg1: memref<64x32xf32, #tpu.memory_space<vmem>>, %arg2: memref<64x32xf32, #tpu.memory_space<vmem>>, %arg3: memref<32x128xf32, #tpu.memory_space<vmem>>, %arg4: memref<32x128xf32, #tpu.memory_space<vmem>>, %arg5: memref<1x128xf32, #tpu.memory_space<vmem>>, %arg6: memref<128x128xf32, #tpu.memory_space<vmem>>, %arg7: memref<1x128xf32, #tpu.memory_space<vmem>>, %arg8: memref<64x128xf32, #tpu.memory_space<vmem>>, %arg9: memref<64x128xf32, #tpu.memory_space<vmem>>) attributes {dimension_semantics = [#tpu.dimension_semantics<parallel>], iteration_bounds = array<i64: 1>, scalar_prefetch = 0 : i64, scratch_operands = 0 : i64, tpu.core_type = #tpu.core_type<tc>, window_params = [{transform_indices = @transform_0, window_bounds = array<i64: 64, 32>}, {transform_indices = @transform_1, window_bounds = array<i64: 64, 32>}, {pipeline_mode = #tpu.pipeline_mode<synchronous>, transform_indices = @transform_2, window_bounds = array<i64: 32, 128>}, {pipeline_mode = #tpu.pipeline_mode<synchronous>, transform_indices = @transform_3, window_bounds = array<i64: 32, 128>}, {pipeline_mode = #tpu.pipeline_mode<synchronous>, transform_indices = @transform_4, window_bounds = array<i64: 1, 128>}, {pipeline_mode = #tpu.pipeline_mode<synchronous>, transform_indices = @transform_5, window_bounds = array<i64: 128, 128>}, {pipeline_mode = #tpu.pipeline_mode<synchronous>, transform_indices = @transform_6, window_bounds = array<i64: 1, 128>}, {transform_indices = @transform_7, window_bounds = array<i64: 64, 128>}, {transform_indices = @transform_8, window_bounds = array<i64: 64, 128>}]} {
    %c0 = arith.constant 0 : index
    %c0_0 = arith.constant 0 : index
    %0 = vector.load %arg1[%c0, %c0_0] : memref<64x32xf32, #tpu.memory_space<vmem>>, vector<64x32xf32>
    %c0_1 = arith.constant 0 : index
    %c0_2 = arith.constant 0 : index
    %1 = vector.load %arg2[%c0_1, %c0_2] : memref<64x32xf32, #tpu.memory_space<vmem>>, vector<64x32xf32>
    %c0_3 = arith.constant 0 : index
    %c0_4 = arith.constant 0 : index
    %2 = vector.load %arg3[%c0_3, %c0_4] : memref<32x128xf32, #tpu.memory_space<vmem>>, vector<32x128xf32>
    %cst = arith.constant dense<0.000000e+00> : vector<64x128xf32>
    %3 = tpu.matmul %0, %2, %cst {dimension_numbers = #tpu.dot_dimension_numbers<[1], [0], [0], [1], [0, 0, 1, 1], [], []>} : vector<64x32xf32>, vector<32x128xf32>, vector<64x128xf32> -> vector<64x128xf32>
    %c0_5 = arith.constant 0 : index
    %c0_6 = arith.constant 0 : index
    %4 = vector.load %arg4[%c0_5, %c0_6] : memref<32x128xf32, #tpu.memory_space<vmem>>, vector<32x128xf32>
    %cst_7 = arith.constant dense<0.000000e+00> : vector<64x128xf32>
    %5 = tpu.matmul %1, %4, %cst_7 {dimension_numbers = #tpu.dot_dimension_numbers<[1], [0], [0], [1], [0, 0, 1, 1], [], []>} : vector<64x32xf32>, vector<32x128xf32>, vector<64x128xf32> -> vector<64x128xf32>
    %6 = arith.addf %3, %5 : vector<64x128xf32>
    %c0_8 = arith.constant 0 : index
    %c0_9 = arith.constant 0 : index
    %7 = vector.load %arg5[%c0_8, %c0_9] : memref<1x128xf32, #tpu.memory_space<vmem>>, vector<1x128xf32>
    %8 = vector.broadcast %7 : vector<1x128xf32> to vector<64x128xf32>
    %9 = arith.addf %6, %8 : vector<64x128xf32>
    %cst_10 = arith.constant 0.000000e+00 : f32
    %10 = vector.broadcast %cst_10 : f32 to vector<64x128xf32>
    %11 = arith.cmpf ogt, %9, %10 : vector<64x128xf32>
    %cst_11 = arith.constant 2.000000e-01 : f32
    %12 = vector.broadcast %cst_11 : f32 to vector<64x128xf32>
    %13 = arith.mulf %12, %9 : vector<64x128xf32>
    %14 = arith.select %11, %9, %13 : vector<64x128xi1>, vector<64x128xf32>
    %c0_12 = arith.constant 0 : index
    %c0_13 = arith.constant 0 : index
    %15 = vector.load %arg9[%c0_12, %c0_13] : memref<64x128xf32, #tpu.memory_space<vmem>>, vector<64x128xf32>
    tpu.vector_store %arg9[%c0_12, %c0_13], %14 {strides = array<i32>} : memref<64x128xf32, #tpu.memory_space<vmem>>, vector<64x128xf32>,
    %c0_14 = arith.constant 0 : index
    %c0_15 = arith.constant 0 : index
    %16 = vector.load %arg6[%c0_14, %c0_15] : memref<128x128xf32, #tpu.memory_space<vmem>>, vector<128x128xf32>
    %cst_16 = arith.constant dense<0.000000e+00> : vector<64x128xf32>
    %17 = tpu.matmul %14, %16, %cst_16 {dimension_numbers = #tpu.dot_dimension_numbers<[1], [0], [0], [1], [0, 0, 1, 1], [], []>} : vector<64x128xf32>, vector<128x128xf32>, vector<64x128xf32> -> vector<64x128xf32>
    %c0_17 = arith.constant 0 : index
    %c0_18 = arith.constant 0 : index
    %18 = vector.load %arg7[%c0_17, %c0_18] : memref<1x128xf32, #tpu.memory_space<vmem>>, vector<1x128xf32>
    %19 = vector.broadcast %18 : vector<1x128xf32> to vector<64x128xf32>
    %20 = arith.addf %17, %19 : vector<64x128xf32>
    %c0_19 = arith.constant 0 : index
    %c0_20 = arith.constant 0 : index
    %21 = vector.load %arg8[%c0_19, %c0_20] : memref<64x128xf32, #tpu.memory_space<vmem>>, vector<64x128xf32>
    tpu.vector_store %arg8[%c0_19, %c0_20], %20 {strides = array<i32>} : memref<64x128xf32, #tpu.memory_space<vmem>>, vector<64x128xf32>,
    return
  }
  func.func @transform_0(%arg0: i32) -> (i32, i32) {
    %c0_i32 = arith.constant 0 : i32
    %c0_i32_0 = arith.constant 0 : i32
    return %arg0, %c0_i32 : i32, i32
  }
  func.func @transform_1(%arg0: i32) -> (i32, i32) {
    %c0_i32 = arith.constant 0 : i32
    %c0_i32_0 = arith.constant 0 : i32
    return %arg0, %c0_i32 : i32, i32
  }
  func.func @transform_2(%arg0: i32) -> (i32, i32) {
    %c0_i32 = arith.constant 0 : i32
    %c0_i32_0 = arith.constant 0 : i32
    %c0_i32_1 = arith.constant 0 : i32
    return %c0_i32, %c0_i32_0 : i32, i32
  }
  func.func @transform_3(%arg0: i32) -> (i32, i32) {
    %c0_i32 = arith.constant 0 : i32
    %c0_i32_0 = arith.constant 0 : i32
    %c0_i32_1 = arith.constant 0 : i32
    return %c0_i32, %c0_i32_0 : i32, i32
  }
  func.func @transform_4(%arg0: i32) -> (i32, i32) {
    %c0_i32 = arith.constant 0 : i32
    %c0_i32_0 = arith.constant 0 : i32
    %c0_i32_1 = arith.constant 0 : i32
    return %c0_i32, %c0_i32_0 : i32, i32
  }
  func.func @transform_5(%arg0: i32) -> (i32, i32) {
    %c0_i32 = arith.constant 0 : i32
    %c0_i32_0 = arith.constant 0 : i32
    %c0_i32_1 = arith.constant 0 : i32
    return %c0_i32, %c0_i32_0 : i32, i32
  }
  func.func @transform_6(%arg0: i32) -> (i32, i32) {
    %c0_i32 = arith.constant 0 : i32
    %c0_i32_0 = arith.constant 0 : i32
    %c0_i32_1 = arith.constant 0 : i32
    return %c0_i32, %c0_i32_0 : i32, i32
  }
  func.func @transform_7(%arg0: i32) -> (i32, i32) {
    %c0_i32 = arith.constant 0 : i32
    %c0_i32_0 = arith.constant 0 : i32
    return %arg0, %c0_i32 : i32, i32
  }
  func.func @transform_8(%arg0: i32) -> (i32, i32) {
    %c0_i32 = arith.constant 0 : i32
    %c0_i32_0 = arith.constant 0 : i32
    return %arg0, %c0_i32 : i32, i32
  }
}

</mosaic_0001>

<llo_original>
// kernel: tpu_custom_call.1
$region0: #{tpu_custom_call.1}
  #allocation0 [shape = 'u32[]', space=smem, size = 0x4, offset = 0x4, fixed_abs, tag = 'smem constant byte address 0x4 - core index']
  #allocation1 [shape = 'u32[144,128]{1,0:T(1,128)}', space=vmem, size = 0x12000, scoped, tag = 'internal scratch']
  %s0 = inlined_call_operand.vmem [shape: f32[64,32], index: 0, kind: input, shape index: {}]
  %s1 = inlined_call_operand.vmem [shape: f32[64,32], index: 1, kind: input, shape index: {}]
  %s2 = inlined_call_operand.vmem [shape: f32[32,128], index: 2, kind: input, shape index: {}]
  %s3 = inlined_call_operand.vmem [shape: f32[32,128], index: 3, kind: input, shape index: {}]
  %s4 = inlined_call_operand.vmem [shape: f32[1,128], index: 4, kind: input, shape index: {}]
  %s5 = inlined_call_operand.vmem [shape: f32[128,128], index: 5, kind: input, shape index: {}]
  %s6 = inlined_call_operand.vmem [shape: f32[1,128], index: 6, kind: input, shape index: {}]
  %s7 = inlined_call_operand.hbm [shape: f32[64,128], index: 7, kind: output, shape index: {0}]
  %s8 = inlined_call_operand.hbm [shape: f32[64,128], index: 8, kind: output, shape index: {1}]
  %9 = xla_tuple %s7, %s8
  %s10 = sld [smem:[#allocation0]]
  $region46: #{tpu_custom_call.1} parent=0
    _
  %s12 = ssub.s32 1, %s10
  %s13 = scalar_select 0, %s12, %s10
  $region1: #{tpu_custom_call.1} parent=0
    #allocation2 [shape = 'u8[32768]{0}', space=vmem, size = 0x8000, scoped, tag = 'output window, operand 0, single buffered']
    #allocation3 [shape = 's32[1]{0}', space=sflag, size = 0x4, scoped, tag = 'scoped memory for tpu_custom_call.1']
    #allocation4 [shape = 'u8[32768]{0}', space=vmem, size = 0x8000, scoped, tag = 'output window, operand 1, single buffered']
    #allocation5 [shape = 's32[1]{0}', space=sflag, size = 0x4, scoped, tag = 'scoped memory for tpu_custom_call.1']
    %14 = vsyncpa [#allocation3], 0
    %15 = vsyncpa [#allocation5], 0
    // Predicated region
    $region2: #{tpu_custom_call.1} parent=1 // pred_check
      _
    $region3: #{tpu_custom_call.1} parent=1 // pred_check_branch
      %17 = sbr.rel (0) target = $region5
    $region4: #{tpu_custom_call.1} parent=1 // pred_region
      _
    $region5: #{tpu_custom_call.1} parent=1 // pred_fallthru
      _
    // Predicated region
    $region6: #{tpu_custom_call.1} parent=1 // pred_check
      _
    $region7: #{tpu_custom_call.1} parent=1 // pred_check_branch
      %19 = sbr.rel (0) target = $region9
    $region8: #{tpu_custom_call.1} parent=1 // pred_region
      _
    $region9: #{tpu_custom_call.1} parent=1 // pred_fallthru
      _
    // Predicated region
    $region10: #{tpu_custom_call.1} parent=1 // pred_check
      _
    $region11: #{tpu_custom_call.1} parent=1 // pred_check_branch
      %21 = sbr.rel (0) target = $region13
    $region12: #{tpu_custom_call.1} parent=1 // pred_region
      _
    $region13: #{tpu_custom_call.1} parent=1 // pred_fallthru
      _
    // Predicated region
    $region14: #{tpu_custom_call.1} parent=1 // pred_check
      _
    $region15: #{tpu_custom_call.1} parent=1 // pred_check_branch
      %23 = sbr.rel (0) target = $region17
    $region16: #{tpu_custom_call.1} parent=1 // pred_region
      _
    $region17: #{tpu_custom_call.1} parent=1 // pred_fallthru
      _
    // Predicated region
    $region18: #{tpu_custom_call.1} parent=1 // pred_check
      _
    $region19: #{tpu_custom_call.1} parent=1 // pred_check_branch
      %25 = sbr.rel (0) target = $region21
    $region20: #{tpu_custom_call.1} parent=1 // pred_region
      _
    $region21: #{tpu_custom_call.1} parent=1 // pred_fallthru
      _
    // Predicated region
    $region22: #{tpu_custom_call.1} parent=1 // pred_check
      _
    $region23: #{tpu_custom_call.1} parent=1 // pred_check_branch
      %27 = sbr.rel (0) target = $region25
    $region24: #{tpu_custom_call.1} parent=1 // pred_region
      _
    $region25: #{tpu_custom_call.1} parent=1 // pred_fallthru
      _
    // Predicated region
    $region26: #{tpu_custom_call.1} parent=1 // pred_check
      _
    $region27: #{tpu_custom_call.1} parent=1 // pred_check_branch
      %29 = sbr.rel (0) target = $region29
    $region28: #{tpu_custom_call.1} parent=1 // pred_region
      _
    $region29: #{tpu_custom_call.1} parent=1 // pred_fallthru
      _
    %v30 = vld [vmem:[%s0] sm:$0xff]
    %v31 = vld [vmem:[%s0 + $0x8] sm:$0xff]
    %v32 = vld [vmem:[%s0 + $0x10] sm:$0xff]
    %v33 = vld [vmem:[%s0 + $0x18] sm:$0xff]
    %v34 = vld [vmem:[%s0 + $0x20] sm:$0xff]
    %v35 = vld [vmem:[%s0 + $0x28] sm:$0xff]
    %v36 = vld [vmem:[%s0 + $0x30] sm:$0xff]
    %v37 = vld [vmem:[%s0 + $0x38] sm:$0xff]
    %v38 = vld [vmem:[%s1] sm:$0xff]
    %v39 = vld [vmem:[%s1 + $0x8] sm:$0xff]
    %v40 = vld [vmem:[%s1 + $0x10] sm:$0xff]
    %v41 = vld [vmem:[%s1 + $0x18] sm:$0xff]
    %v42 = vld [vmem:[%s1 + $0x20] sm:$0xff]
    %v43 = vld [vmem:[%s1 + $0x28] sm:$0xff]
    %v44 = vld [vmem:[%s1 + $0x30] sm:$0xff]
    %v45 = vld [vmem:[%s1 + $0x38] sm:$0xff]
    %v46 = vld [vmem:[%s2] sm:$0xff]
    %v47 = vld [vmem:[%s2 + $0x8] sm:$0xff]
    %v48 = vld [vmem:[%s2 + $0x10] sm:$0xff]
    %v49 = vld [vmem:[%s2 + $0x18] sm:$0xff]
    %v50 = vld [vmem:[%s3] sm:$0xff]
    %v51 = vld [vmem:[%s3 + $0x8] sm:$0xff]
    %v52 = vld [vmem:[%s3 + $0x10] sm:$0xff]
    %v53 = vld [vmem:[%s3 + $0x18] sm:$0xff]
    %vm54 = vcmask 261120
    %v56 = vsel %vm54, %v38, 0
    %v59 = vsel %vm54, %v39, 0
    %v62 = vsel %vm54, %v40, 0
    %v65 = vsel %vm54, %v41, 0
    %v68 = vsel %vm54, %v42, 0
    %v71 = vsel %vm54, %v43, 0
    %v74 = vsel %vm54, %v44, 0
    %v77 = vsel %vm54, %v45, 0
    %79 = vmatprep.subr.mxu0 0.0
    %80 = vmatpush1.msra.mxu0 0.0
    %81 = vmatprep.subr.mxu0 0.0
    %82 = vmatpush1.msra.mxu0 0.0
    %83 = vmatprep.subr.mxu0 0.0
    %84 = vmatpush1.msra.mxu0 0.0
    %85 = vmatprep.subr.mxu0 0.0
    %86 = vmatpush1.msra.mxu0 0.0
    %87 = vmatprep.subr.mxu0 0.0
    %88 = vmatpush1.msra.mxu0 0.0
    %89 = vmatprep.subr.mxu0 0.0
    %90 = vmatpush1.msra.mxu0 0.0
    %91 = vmatprep.subr.mxu0 0.0
    %92 = vmatpush1.msra.mxu0 0.0
    %93 = vmatprep.subr.mxu0 0.0
    %94 = vmatpush1.msra.mxu0 0.0
    %95 = vmatprep.subr.mxu0 0.0
    %96 = vmatpush1.msra.mxu0 0.0
    %97 = vmatprep.subr.mxu0 0.0
    %98 = vmatpush1.msra.mxu0 0.0
    %99 = vmatprep.subr.mxu0 0.0
    %100 = vmatpush1.msra.mxu0 0.0
    %101 = vmatprep.subr.mxu0 0.0
    %102 = vmatpush1.msra.mxu0 0.0
    %103 = vmatprep.subr.mxu0 0.0
    %104 = vmatpush1.msra.mxu0 %v53
    %105 = vmatprep.subr.mxu0 0.0
    %106 = vmatpush1.msra.mxu0 %v52
    %107 = vmatprep.subr.mxu0 0.0
    %108 = vmatpush1.msra.mxu0 %v51
    %109 = vmatprep.subr.mxu0 0.0
    %110 = vmatpush1.msra.mxu0 %v50
    %111 = vmatprep.subr.mxu0 0.0
    %112 = vmatpush2.msra.mxu0 0.0
    %113 = vmatprep.subr.mxu0 0.0
    %114 = vmatpush2.msra.mxu0 0.0
    %115 = vmatprep.subr.mxu0 0.0
    %116 = vmatpush2.msra.mxu0 0.0
    %117 = vmatprep.subr.mxu0 0.0
    %118 = vmatpush2.msra.mxu0 0.0
    %119 = vmatprep.subr.mxu0 0.0
    %120 = vmatpush2.msra.mxu0 0.0
    %121 = vmatprep.subr.mxu0 0.0
    %122 = vmatpush2.msra.mxu0 0.0
    %123 = vmatprep.subr.mxu0 0.0
    %124 = vmatpush2.msra.mxu0 0.0
    %125 = vmatprep.subr.mxu0 0.0
    %126 = vmatpush2.msra.mxu0 0.0
    %127 = vmatprep.subr.mxu0 0.0
    %128 = vmatpush2.msra.mxu0 0.0
    %129 = vmatprep.subr.mxu0 0.0
    %130 = vmatpush2.msra.mxu0 0.0
    %131 = vmatprep.subr.mxu0 0.0
    %132 = vmatpush2.msra.mxu0 0.0
    %133 = vmatprep.subr.mxu0 0.0
    %134 = vmatpush2.msra.mxu0 0.0
    %135 = vmatprep.subr.mxu0 0.0
    %136 = vmatpush2.msra.mxu0 0.0
    %137 = vmatprep.subr.mxu0 0.0
    %138 = vmatpush2.msra.mxu0 0.0
    %139 = vmatprep.subr.mxu0 0.0
    %140 = vmatpush2.msra.mxu0 0.0
    %141 = vmatprep.subr.mxu0 0.0
    %142 = vmatpush2.msra.mxu0 0.0
    %143 = vmatprep.mubr.f32.mxu0 0.0
    %144 = vmatmul.mubr.f32.gmra.mxu0 %v56
    %v145 = vpop.f32.mrf.mxu0
    %v146 = vadd.f32 0.0, %v145
    %v147 = vpop.f32.mrf.mxu0
    %148 = vmatprep.mubr.f32.mxu0 0.0
    %149 = vmatmul.mubr.f32.gmra.mxu0 %v59
    %v150 = vpop.f32.mrf.mxu0
    %v151 = vadd.f32 0.0, %v150
    %v152 = vpop.f32.mrf.mxu0
    %153 = vmatprep.mubr.f32.mxu0 0.0
    %154 = vmatmul.mubr.f32.gmra.mxu0 %v62
    %v155 = vpop.f32.mrf.mxu0
    %v156 = vadd.f32 0.0, %v155
    %v157 = vpop.f32.mrf.mxu0
    %158 = vmatprep.mubr.f32.mxu0 0.0
    %159 = vmatmul.mubr.f32.gmra.mxu0 %v65
    %v160 = vpop.f32.mrf.mxu0
    %v161 = vadd.f32 0.0, %v160
    %v162 = vpop.f32.mrf.mxu0
    %163 = vmatprep.mubr.f32.mxu0 0.0
    %164 = vmatmul.mubr.f32.gmra.mxu0 %v68
    %v165 = vpop.f32.mrf.mxu0
    %v166 = vadd.f32 0.0, %v165
    %v167 = vpop.f32.mrf.mxu0
    %168 = vmatprep.mubr.f32.mxu0 0.0
    %169 = vmatmul.mubr.f32.gmra.mxu0 %v71
    %v170 = vpop.f32.mrf.mxu0
    %v171 = vadd.f32 0.0, %v170
    %v172 = vpop.f32.mrf.mxu0
    %173 = vmatprep.mubr.f32.mxu0 0.0
    %174 = vmatmul.mubr.f32.gmra.mxu0 %v74
    %v175 = vpop.f32.mrf.mxu0
    %v176 = vadd.f32 0.0, %v175
    %v177 = vpop.f32.mrf.mxu0
    %178 = vmatprep.mubr.f32.mxu0 0.0
    %179 = vmatmul.mubr.f32.gmra.mxu0 %v77
    %v180 = vpop.f32.mrf.mxu0
    %v181 = vadd.f32 0.0, %v180
    %v182 = vpop.f32.mrf.mxu0
    %183 = vdwg.mxu0
    %v185 = vsel %vm54, %v30, 0
    %v188 = vsel %vm54, %v31, 0
    %v191 = vsel %vm54, %v32, 0
    %v194 = vsel %vm54, %v33, 0
    %v197 = vsel %vm54, %v34, 0
    %v200 = vsel %vm54, %v35, 0
    %v203 = vsel %vm54, %v36, 0
    %v206 = vsel %vm54, %v37, 0
    %208 = vmatprep.subr.mxu0 0.0
    %209 = vmatpush1.msra.mxu0 0.0
    %210 = vmatprep.subr.mxu0 0.0
    %211 = vmatpush1.msra.mxu0 0.0
    %212 = vmatprep.subr.mxu0 0.0
    %213 = vmatpush1.msra.mxu0 0.0
    %214 = vmatprep.subr.mxu0 0.0
    %215 = vmatpush1.msra.mxu0 0.0
    %216 = vmatprep.subr.mxu0 0.0
    %217 = vmatpush1.msra.mxu0 0.0
    %218 = vmatprep.subr.mxu0 0.0
    %219 = vmatpush1.msra.mxu0 0.0
    %220 = vmatprep.subr.mxu0 0.0
    %221 = vmatpush1.msra.mxu0 0.0
    %222 = vmatprep.subr.mxu0 0.0
    %223 = vmatpush1.msra.mxu0 0.0
    %224 = vmatprep.subr.mxu0 0.0
    %225 = vmatpush1.msra.mxu0 0.0
    %226 = vmatprep.subr.mxu0 0.0
    %227 = vmatpush1.msra.mxu0 0.0
    %228 = vmatprep.subr.mxu0 0.0
    %229 = vmatpush1.msra.mxu0 0.0
    %230 = vmatprep.subr.mxu0 0.0
    %231 = vmatpush1.msra.mxu0 0.0
    %232 = vmatprep.subr.mxu0 0.0
    %233 = vmatpush1.msra.mxu0 %v49
    %234 = vmatprep.subr.mxu0 0.0
    %235 = vmatpush1.msra.mxu0 %v48
    %236 = vmatprep.subr.mxu0 0.0
    %237 = vmatpush1.msra.mxu0 %v47
    %238 = vmatprep.subr.mxu0 0.0
    %239 = vmatpush1.msra.mxu0 %v46
    %240 = vmatprep.subr.mxu0 0.0
    %241 = vmatpush2.msra.mxu0 0.0
    %242 = vmatprep.subr.mxu0 0.0
    %243 = vmatpush2.msra.mxu0 0.0
    %244 = vmatprep.subr.mxu0 0.0
    %245 = vmatpush2.msra.mxu0 0.0
    %246 = vmatprep.subr.mxu0 0.0
    %247 = vmatpush2.msra.mxu0 0.0
    %248 = vmatprep.subr.mxu0 0.0
    %249 = vmatpush2.msra.mxu0 0.0
    %250 = vmatprep.subr.mxu0 0.0
    %251 = vmatpush2.msra.mxu0 0.0
    %252 = vmatprep.subr.mxu0 0.0
    %253 = vmatpush2.msra.mxu0 0.0
    %254 = vmatprep.subr.mxu0 0.0
    %255 = vmatpush2.msra.mxu0 0.0
    %256 = vmatprep.subr.mxu0 0.0
    %257 = vmatpush2.msra.mxu0 0.0
    %258 = vmatprep.subr.mxu0 0.0
    %259 = vmatpush2.msra.mxu0 0.0
    %260 = vmatprep.subr.mxu0 0.0
    %261 = vmatpush2.msra.mxu0 0.0
    %262 = vmatprep.subr.mxu0 0.0
    %263 = vmatpush2.msra.mxu0 0.0
    %264 = vmatprep.subr.mxu0 0.0
    %265 = vmatpush2.msra.mxu0 0.0
    %266 = vmatprep.subr.mxu0 0.0
    %267 = vmatpush2.msra.mxu0 0.0
    %268 = vmatprep.subr.mxu0 0.0
    %269 = vmatpush2.msra.mxu0 0.0
    %270 = vmatprep.subr.mxu0 0.0
    %271 = vmatpush2.msra.mxu0 0.0
    %272 = vmatprep.mubr.f32.mxu0 0.0
    %273 = vmatmul.mubr.f32.gmra.mxu0 %v185
    %v274 = vpop.f32.mrf.mxu0
    %v275 = vadd.f32 %v146, %v274
    %v276 = vpop.f32.mrf.mxu0
    %277 = vmatprep.mubr.f32.mxu0 0.0
    %278 = vmatmul.mubr.f32.gmra.mxu0 %v188
    %v279 = vpop.f32.mrf.mxu0
    %v280 = vadd.f32 %v151, %v279
    %v281 = vpop.f32.mrf.mxu0
    %282 = vmatprep.mubr.f32.mxu0 0.0
    %283 = vmatmul.mubr.f32.gmra.mxu0 %v191
    %v284 = vpop.f32.mrf.mxu0
    %v285 = vadd.f32 %v156, %v284
    %v286 = vpop.f32.mrf.mxu0
    %287 = vmatprep.mubr.f32.mxu0 0.0
    %288 = vmatmul.mubr.f32.gmra.mxu0 %v194
    %v289 = vpop.f32.mrf.mxu0
    %v290 = vadd.f32 %v161, %v289
    %v291 = vpop.f32.mrf.mxu0
    %292 = vmatprep.mubr.f32.mxu0 0.0
    %293 = vmatmul.mubr.f32.gmra.mxu0 %v197
    %v294 = vpop.f32.mrf.mxu0
    %v295 = vadd.f32 %v166, %v294
    %v296 = vpop.f32.mrf.mxu0
    %297 = vmatprep.mubr.f32.mxu0 0.0
    %298 = vmatmul.mubr.f32.gmra.mxu0 %v200
    %v299 = vpop.f32.mrf.mxu0
    %v300 = vadd.f32 %v171, %v299
    %v301 = vpop.f32.mrf.mxu0
    %302 = vmatprep.mubr.f32.mxu0 0.0
    %303 = vmatmul.mubr.f32.gmra.mxu0 %v203
    %v304 = vpop.f32.mrf.mxu0
    %v305 = vadd.f32 %v176, %v304
    %v306 = vpop.f32.mrf.mxu0
    %307 = vmatprep.mubr.f32.mxu0 0.0
    %308 = vmatmul.mubr.f32.gmra.mxu0 %v206
    %v309 = vpop.f32.mrf.mxu0
    %v310 = vadd.f32 %v181, %v309
    %v311 = vpop.f32.mrf.mxu0
    %312 = vdwg.mxu0
    %v313 = vld [vmem:[%s4] sm:$0x1]
    %v315 = vlaneseq
    %v316 = vshrl.u32 %v315, 7
    %v317 = vsub.s32 0, %v316
    %v318 = vrot.slane %v313, %v317
    %v320 = vadd.f32 %v275, %v318
    %v321 = vadd.f32 %v280, %v318
    %v322 = vadd.f32 %v285, %v318
    %v323 = vadd.f32 %v290, %v318
    %v324 = vadd.f32 %v295, %v318
    %v325 = vadd.f32 %v300, %v318
    %v326 = vadd.f32 %v305, %v318
    %v327 = vadd.f32 %v310, %v318
    %vm328 = vcmp.gt.f32.partialorder %v320, 0.0
    %vm329 = vcmp.gt.f32.partialorder %v321, 0.0
    %vm330 = vcmp.gt.f32.partialorder %v322, 0.0
    %vm331 = vcmp.gt.f32.partialorder %v323, 0.0
    %vm332 = vcmp.gt.f32.partialorder %v324, 0.0
    %vm333 = vcmp.gt.f32.partialorder %v325, 0.0
    %vm334 = vcmp.gt.f32.partialorder %v326, 0.0
    %vm335 = vcmp.gt.f32.partialorder %v327, 0.0
    %v336 = vmul.f32 %v320, 0.2
    %v337 = vmul.f32 %v321, 0.2
    %v338 = vmul.f32 %v322, 0.2
    %v339 = vmul.f32 %v323, 0.2
    %v340 = vmul.f32 %v324, 0.2
    %v341 = vmul.f32 %v325, 0.2
    %v342 = vmul.f32 %v326, 0.2
    %v343 = vmul.f32 %v327, 0.2
    %v344 = vsel %vm328, %v320, %v336
    %v345 = vsel %vm329, %v321, %v337
    %v346 = vsel %vm330, %v322, %v338
    %v347 = vsel %vm331, %v323, %v339
    %v348 = vsel %vm332, %v324, %v340
    %v349 = vsel %vm333, %v325, %v341
    %v350 = vsel %vm334, %v326, %v342
    %v351 = vsel %vm335, %v327, %v343
    %352 = vst [vmem:[#allocation4] sm:$0xff] %v344
    %353 = vst [vmem:[#allocation4 + $0x8] sm:$0xff] %v345
    %354 = vst [vmem:[#allocation4 + $0x10] sm:$0xff] %v346
    %355 = vst [vmem:[#allocation4 + $0x18] sm:$0xff] %v347
    %356 = vst [vmem:[#allocation4 + $0x20] sm:$0xff] %v348
    %357 = vst [vmem:[#allocation4 + $0x28] sm:$0xff] %v349
    %358 = vst [vmem:[#allocation4 + $0x30] sm:$0xff] %v350
    %359 = vst [vmem:[#allocation4 + $0x38] sm:$0xff] %v351
    %v360 = vld [vmem:[%s5] sm:$0xff]
    %v361 = vld [vmem:[%s5 + $0x8] sm:$0xff]
    %v362 = vld [vmem:[%s5 + $0x10] sm:$0xff]
    %v363 = vld [vmem:[%s5 + $0x18] sm:$0xff]
    %v364 = vld [vmem:[%s5 + $0x20] sm:$0xff]
    %v365 = vld [vmem:[%s5 + $0x28] sm:$0xff]
    %v366 = vld [vmem:[%s5 + $0x30] sm:$0xff]
    %v367 = vld [vmem:[%s5 + $0x38] sm:$0xff]
    %v368 = vld [vmem:[%s5 + $0x40] sm:$0xff]
    %v369 = vld [vmem:[%s5 + $0x48] sm:$0xff]
    %v370 = vld [vmem:[%s5 + $0x50] sm:$0xff]
    %v371 = vld [vmem:[%s5 + $0x58] sm:$0xff]
    %v372 = vld [vmem:[%s5 + $0x60] sm:$0xff]
    %v373 = vld [vmem:[%s5 + $0x68] sm:$0xff]
    %v374 = vld [vmem:[%s5 + $0x70] sm:$0xff]
    %v375 = vld [vmem:[%s5 + $0x78] sm:$0xff]
    %v376 = vld [vmem:[%s6] sm:$0x1]
    %v378 = vlaneseq
    %v379 = vshrl.u32 %v378, 7
    %v380 = vsub.s32 0, %v379
    %v381 = vrot.slane %v376, %v380
    %383 = vmatprep.subr.mxu0 0.0
    %384 = vmatpush1.msra.mxu0 %v375
    %385 = vmatprep.subr.mxu0 0.0
    %386 = vmatpush1.msra.mxu0 %v374
    %387 = vmatprep.subr.mxu0 0.0
    %388 = vmatpush1.msra.mxu0 %v373
    %389 = vmatprep.subr.mxu0 0.0
    %390 = vmatpush1.msra.mxu0 %v372
    %391 = vmatprep.subr.mxu0 0.0
    %392 = vmatpush1.msra.mxu0 %v371
    %393 = vmatprep.subr.mxu0 0.0
    %394 = vmatpush1.msra.mxu0 %v370
    %395 = vmatprep.subr.mxu0 0.0
    %396 = vmatpush1.msra.mxu0 %v369
    %397 = vmatprep.subr.mxu0 0.0
    %398 = vmatpush1.msra.mxu0 %v368
    %399 = vmatprep.subr.mxu0 0.0
    %400 = vmatpush1.msra.mxu0 %v367
    %401 = vmatprep.subr.mxu0 0.0
    %402 = vmatpush1.msra.mxu0 %v366
    %403 = vmatprep.subr.mxu0 0.0
    %404 = vmatpush1.msra.mxu0 %v365
    %405 = vmatprep.subr.mxu0 0.0
    %406 = vmatpush1.msra.mxu0 %v364
    %407 = vmatprep.subr.mxu0 0.0
    %408 = vmatpush1.msra.mxu0 %v363
    %409 = vmatprep.subr.mxu0 0.0
    %410 = vmatpush1.msra.mxu0 %v362
    %411 = vmatprep.subr.mxu0 0.0
    %412 = vmatpush1.msra.mxu0 %v361
    %413 = vmatprep.subr.mxu0 0.0
    %414 = vmatpush1.msra.mxu0 %v360
    %415 = vmatprep.subr.mxu0 0.0
    %416 = vmatpush2.msra.mxu0 0.0
    %417 = vmatprep.subr.mxu0 0.0
    %418 = vmatpush2.msra.mxu0 0.0
    %419 = vmatprep.subr.mxu0 0.0
    %420 = vmatpush2.msra.mxu0 0.0
    %421 = vmatprep.subr.mxu0 0.0
    %422 = vmatpush2.msra.mxu0 0.0
    %423 = vmatprep.subr.mxu0 0.0
    %424 = vmatpush2.msra.mxu0 0.0
    %425 = vmatprep.subr.mxu0 0.0
    %426 = vmatpush2.msra.mxu0 0.0
    %427 = vmatprep.subr.mxu0 0.0
    %428 = vmatpush2.msra.mxu0 0.0
    %429 = vmatprep.subr.mxu0 0.0
    %430 = vmatpush2.msra.mxu0 0.0
    %431 = vmatprep.subr.mxu0 0.0
    %432 = vmatpush2.msra.mxu0 0.0
    %433 = vmatprep.subr.mxu0 0.0
    %434 = vmatpush2.msra.mxu0 0.0
    %435 = vmatprep.subr.mxu0 0.0
    %436 = vmatpush2.msra.mxu0 0.0
    %437 = vmatprep.subr.mxu0 0.0
    %438 = vmatpush2.msra.mxu0 0.0
    %439 = vmatprep.subr.mxu0 0.0
    %440 = vmatpush2.msra.mxu0 0.0
    %441 = vmatprep.subr.mxu0 0.0
    %442 = vmatpush2.msra.mxu0 0.0
    %443 = vmatprep.subr.mxu0 0.0
    %444 = vmatpush2.msra.mxu0 0.0
    %445 = vmatprep.subr.mxu0 0.0
    %446 = vmatpush2.msra.mxu0 0.0
    %447 = vmatprep.mubr.f32.mxu0 0.0
    %448 = vmatmul.mubr.f32.gmra.mxu0 %v344
    %v449 = vpop.f32.mrf.mxu0
    %v450 = vadd.f32 %v381, %v449
    %v451 = vpop.f32.mrf.mxu0
    %452 = vmatprep.mubr.f32.mxu0 0.0
    %453 = vmatmul.mubr.f32.gmra.mxu0 %v345
    %v454 = vpop.f32.mrf.mxu0
    %v455 = vadd.f32 %v381, %v454
    %v456 = vpop.f32.mrf.mxu0
    %457 = vmatprep.mubr.f32.mxu0 0.0
    %458 = vmatmul.mubr.f32.gmra.mxu0 %v346
    %v459 = vpop.f32.mrf.mxu0
    %v460 = vadd.f32 %v381, %v459
    %v461 = vpop.f32.mrf.mxu0
    %462 = vmatprep.mubr.f32.mxu0 0.0
    %463 = vmatmul.mubr.f32.gmra.mxu0 %v347
    %v464 = vpop.f32.mrf.mxu0
    %v465 = vadd.f32 %v381, %v464
    %v466 = vpop.f32.mrf.mxu0
    %467 = vmatprep.mubr.f32.mxu0 0.0
    %468 = vmatmul.mubr.f32.gmra.mxu0 %v348
    %v469 = vpop.f32.mrf.mxu0
    %v470 = vadd.f32 %v381, %v469
    %v471 = vpop.f32.mrf.mxu0
    %472 = vmatprep.mubr.f32.mxu0 0.0
    %473 = vmatmul.mubr.f32.gmra.mxu0 %v349
    %v474 = vpop.f32.mrf.mxu0
    %v475 = vadd.f32 %v381, %v474
    %v476 = vpop.f32.mrf.mxu0
    %477 = vmatprep.mubr.f32.mxu0 0.0
    %478 = vmatmul.mubr.f32.gmra.mxu0 %v350
    %v479 = vpop.f32.mrf.mxu0
    %v480 = vadd.f32 %v381, %v479
    %v481 = vpop.f32.mrf.mxu0
    %482 = vmatprep.mubr.f32.mxu0 0.0
    %483 = vmatmul.mubr.f32.gmra.mxu0 %v351
    %v484 = vpop.f32.mrf.mxu0
    %v485 = vadd.f32 %v381, %v484
    %v486 = vpop.f32.mrf.mxu0
    %487 = vdwg.mxu0
    %488 = vst [vmem:[#allocation2] sm:$0xff] %v450
    %489 = vst [vmem:[#allocation2 + $0x8] sm:$0xff] %v455
    %490 = vst [vmem:[#allocation2 + $0x10] sm:$0xff] %v460
    %491 = vst [vmem:[#allocation2 + $0x18] sm:$0xff] %v465
    %492 = vst [vmem:[#allocation2 + $0x20] sm:$0xff] %v470
    %493 = vst [vmem:[#allocation2 + $0x28] sm:$0xff] %v475
    %494 = vst [vmem:[#allocation2 + $0x30] sm:$0xff] %v480
    %495 = vst [vmem:[#allocation2 + $0x38] sm:$0xff] %v485
    // Predicated region
    $region30: #{tpu_custom_call.1} parent=1 // pred_check
      _
    $region31: #{tpu_custom_call.1} parent=1 // pred_check_branch
      %497 = sbr.rel (0) target = $region33
    $region32: #{tpu_custom_call.1} parent=1 // pred_region
      %s499 = ssub.s32 1024, 1024
      %500 = vsyncadd [#allocation3], %s499
      %s501 = sshll.u32 [#allocation2], 4
      %s502 = int_to_ptr.vmem [resolvable:$true] %s501
      %507 = dma.vmem_to_hbm [thread:$0]  %s502, 1024, %s7, [#allocation3], 128, 128, 8
    $region33: #{tpu_custom_call.1} parent=1 // pred_fallthru
      _
    // Predicated region
    $region34: #{tpu_custom_call.1} parent=1 // pred_check
      _
    $region35: #{tpu_custom_call.1} parent=1 // pred_check_branch
      %509 = sbr.rel (0) target = $region37
    $region36: #{tpu_custom_call.1} parent=1 // pred_region
      %s511 = ssub.s32 1024, 1024
      %512 = vsyncadd [#allocation5], %s511
      %s513 = sshll.u32 [#allocation4], 4
      %s514 = int_to_ptr.vmem [resolvable:$true] %s513
      %519 = dma.vmem_to_hbm [thread:$0]  %s514, 1024, %s8, [#allocation5], 128, 128, 8
    $region37: #{tpu_custom_call.1} parent=1 // pred_fallthru
      _
    // Predicated region
    $region38: #{tpu_custom_call.1} parent=1 // pred_check
      _
    $region39: #{tpu_custom_call.1} parent=1 // pred_check_branch
      %521 = sbr.rel (0) target = $region41
    $region40: #{tpu_custom_call.1} parent=1 // pred_region
      %522 = dma.done [#allocation3], 1024
    $region41: #{tpu_custom_call.1} parent=1 // pred_fallthru
      _
    // Predicated region
    $region42: #{tpu_custom_call.1} parent=1 // pred_check
      _
    $region43: #{tpu_custom_call.1} parent=1 // pred_check_branch
      %524 = sbr.rel (0) target = $region45
    $region44: #{tpu_custom_call.1} parent=1 // pred_region
      %525 = dma.done [#allocation5], 1024
    $region45: #{tpu_custom_call.1} parent=1 // pred_fallthru
      _
    %526 = vsyncpa [#allocation3], 1
    %527 = vsyncpa [#allocation5], 1

</llo_original>
